<compile_context>
chip_gen: v6e
topology: v6e:2x2x1
jax: 0.10.0
libtpu: 0.0.40
codegen_flags: <defaults>
</compile_context>

<pallas_src>
import functools

import jax
import jax.numpy as jnp
import numpy as np
from jax.experimental import pallas as pl
from jax.experimental.pallas import tpu as pltpu


def _bridge_kernel(x_ref, w_ref, b_ref, o_ref, *, fold_t):
    # fold_t=True : x_ref (Bblk, t, d, hw),  w_ref (d, O)   (pre-scaled)
    # fold_t=False: x_ref (Bblk, t*d, hw),   w_ref (t*d, O) (replicated, pre-scaled)
    # b_ref: (1, O); o_ref: (Bblk, O)
    x = x_ref[...]
    if fold_t:
        # Fold the t axis first: pure VPU vreg adds, f32 accumulation.
        # Shrinks the subsequent XLU lane reduce by a factor of t.
        x = jnp.sum(x, axis=1, dtype=jnp.float32)            # (Bblk, d, hw)
    # Spatial (lane) reduce, accumulating in f32 without a full-tile f32 temp.
    pooled = jnp.sum(x, axis=-1, dtype=jnp.float32)          # (Bblk, d) or (Bblk, t*d)
    # 1x1x1 conv (plus the t-sum in the non-fold path) as one MXU matmul.
    z = jnp.dot(pooled, w_ref[...], preferred_element_type=jnp.float32)
    o_ref[...] = (z + b_ref[...]).astype(o_ref.dtype)


def _vmem_limit_bytes():
    # Generation-aware scoped-VMEM limit: ~3/4 of physical VMEM.
    # v7x: 64 MiB physical -> 48 MiB; v5e/v6e: 128 MiB -> 96 MiB.
    try:
        cap = int(pltpu.get_tpu_info().vmem_capacity_bytes)
    except Exception:
        cap = 64 * 1024 * 1024  # conservative fallback (v7x physical size)
    return int(min((cap * 3) // 4, 100 * 1024 * 1024))


def spatialpool_conv_temporalpool(x, conv_weight, conv_bias):
    """x: (B, t, d, h, w); conv_weight: (O, d, 1, 1, 1); conv_bias: (O,)."""
    B, t, d, h, w = x.shape
    O = conv_weight.shape[0]
    hw = h * w
    itemsize = x.dtype.itemsize

    # One-time host-side prep: fold the 1/(t*h*w) scale into the weight.
    inv_scale = 1.0 / float(t * hw)
    w2 = (conv_weight.reshape(O, d).T * inv_scale).astype(jnp.float32)   # (d, O)
    b2 = conv_bias.reshape(1, O).astype(jnp.float32)                     # (1, O)

    hw_pad = -(-hw // 128) * 128
    # Layout / algorithm choice (see module docstring).
    fold_t = (d % 8 == 0) or (t * d * O * 4 > (4 << 20))
    if fold_t:
        x_k = x.reshape(B, t, d, hw)              # contiguous view, no transpose
        w_k = w2                                  # (d, O), never replicated
        blk_tail = (t, d, hw)
        idx_map = lambda b: (b, 0, 0, 0)
        per_batch_vmem = t * (-(-d // 8) * 8) * hw_pad * itemsize
    else:
        x_k = x.reshape(B, t * d, hw)             # contiguous view, no transpose
        w_k = jnp.tile(w2, (t, 1))                # (t*d, O): folds the t-sum into the matmul
        blk_tail = (t * d, hw)
        idx_map = lambda b: (b, 0, 0)
        per_batch_vmem = (-(-(t * d) // 8) * 8) * hw_pad * itemsize

    # Batch-block sizing against the generation-aware VMEM limit:
    # 2x (double-buffered x slab) + 1x headroom for f32 reduce temporaries.
    vmem_limit = _vmem_limit_bytes()
    w_bytes = int(w_k.size) * 4 + O * 4
    budget = max(vmem_limit - w_bytes - (2 << 20), 1 << 20)
    per_row_cost = 3 * per_batch_vmem
    bblk = max(1, min(B, budget // per_row_cost))
    if bblk < B and bblk >= 8:
        bblk = (bblk // 8) * 8                    # sublane-aligned blocks when partial
    # Optional 2-way split so both v7x TensorCores get work via the "parallel"
    # grid axis -- only when each half-slab stays big enough for efficient DMA
    # and stays sublane-aligned (harmless but pointless on single-TC chips).
    if bblk >= B and B % 16 == 0 and (B // 2) * per_batch_vmem >= (2 << 20):
        bblk = B // 2
    nb = pl.cdiv(B, bblk)

    flops = int(B * t * d * hw + 2 * B * d * O)
    bytes_accessed = int(B * t * d * hw * itemsize + int(w_k.size) * 4 + O * 4
                         + B * O * itemsize)

    out = pl.pallas_call(
        functools.partial(_bridge_kernel, fold_t=fold_t),
        out_shape=jax.ShapeDtypeStruct((B, O), x.dtype),
        grid=(nb,),
        in_specs=[
            pl.BlockSpec((bblk,) + blk_tail, idx_map),
            pl.BlockSpec(tuple(w_k.shape), lambda b: (0, 0)),   # resident weight
            pl.BlockSpec((1, O), lambda b: (0, 0)),             # resident bias
        ],
        out_specs=pl.BlockSpec((bblk, O), lambda b: (b, 0)),
        compiler_params=pltpu.CompilerParams(
            dimension_semantics=("parallel",),
            vmem_limit_bytes=vmem_limit),
        cost_estimate=pl.CostEstimate(
            flops=flops, transcendentals=0, bytes_accessed=bytes_accessed),
    )(x_k, w_k, b2)
    return out


def _reference(x, conv_weight, conv_bias):
    # Pure-JAX reference mirroring the PyTorch forward step by step.
    B, t, d, h, w = x.shape
    O = conv_weight.shape[0]
    xp = jnp.transpose(x, (0, 2, 1, 3, 4))               # (B, d, t, h, w)
    pooled = jnp.mean(xp, axis=(3, 4))                   # (B, d, t)
    wz = conv_weight.reshape(O, d)
    z = jnp.einsum('od,bdt->bot', wz, pooled) + conv_bias[None, :, None]
    return jnp.mean(z, axis=-1)                          # (B, O)


if __name__ == "__main__":
    def run_case(B, t, d, h, w, O, seed):
        key = jax.random.PRNGKey(seed)
        kx, kw, kb = jax.random.split(key, 3)
        x = jax.random.normal(kx, (B, t, d, h, w), dtype=jnp.float32)
        conv_weight = jax.random.normal(kw, (O, d, 1, 1, 1),
                                        dtype=jnp.float32) * 0.1
        conv_bias = jax.random.normal(kb, (O,), dtype=jnp.float32) * 0.1

        out = jax.block_until_ready(
            spatialpool_conv_temporalpool(x, conv_weight, conv_bias))
        ref = _reference(x, conv_weight, conv_bias)
        np.testing.assert_allclose(np.asarray(out), np.asarray(ref),
                                   rtol=1e-5, atol=1e-5)
        assert out.shape == (B, O)

    # Small / sublane-unaligned d -> merged (t*d) sublane path, tiny replicated weight.
    run_case(B=2, t=8, d=4, h=16, w=16, O=32, seed=0)
    # Sublane-aligned d -> in-kernel t-fold path, weight kept at (d, O).
    run_case(B=2, t=4, d=8, h=8, w=8, O=16, seed=1)

    print("KERNEL_OK")
</pallas_src>

<mosaic_0001>
module attributes {stable_mosaic.version = 11 : i64} {
  func.func @_bridge_kernel(%arg0: i32, %arg1: memref<2x32x256xf32, #tpu.memory_space<vmem>>, %arg2: memref<32x32xf32, #tpu.memory_space<vmem>>, %arg3: memref<1x32xf32, #tpu.memory_space<vmem>>, %arg4: memref<2x32xf32, #tpu.memory_space<vmem>>) attributes {dimension_semantics = [#tpu.dimension_semantics<parallel>], iteration_bounds = array<i64: 1>, scalar_prefetch = 0 : i64, scratch_operands = 0 : i64, tpu.core_type = #tpu.core_type<tc>, window_params = [{transform_indices = @transform_0, window_bounds = array<i64: 2, 32, 256>}, {pipeline_mode = #tpu.pipeline_mode<synchronous>, transform_indices = @transform_1, window_bounds = array<i64: 32, 32>}, {pipeline_mode = #tpu.pipeline_mode<synchronous>, transform_indices = @transform_2, window_bounds = array<i64: 1, 32>}, {transform_indices = @transform_3, window_bounds = array<i64: 2, 32>}]} {
    %c0 = arith.constant 0 : index
    %c0_0 = arith.constant 0 : index
    %c0_1 = arith.constant 0 : index
    %0 = vector.load %arg1[%c0, %c0_0, %c0_1] : memref<2x32x256xf32, #tpu.memory_space<vmem>>, vector<2x32x256xf32>
    %cst = arith.constant dense<0.000000e+00> : vector<2x32xf32>
    %1 = vector.multi_reduction <add>, %0, %cst [2] : vector<2x32x256xf32> to vector<2x32xf32>
    %c0_2 = arith.constant 0 : index
    %c0_3 = arith.constant 0 : index
    %2 = vector.load %arg2[%c0_2, %c0_3] : memref<32x32xf32, #tpu.memory_space<vmem>>, vector<32x32xf32>
    %cst_4 = arith.constant dense<0.000000e+00> : vector<2x32xf32>
    %3 = tpu.matmul %1, %2, %cst_4 {dimension_numbers = #tpu.dot_dimension_numbers<[1], [0], [0], [1], [0, 0, 1, 1], [], []>} : vector<2x32xf32>, vector<32x32xf32>, vector<2x32xf32> -> vector<2x32xf32>
    %c0_5 = arith.constant 0 : index
    %c0_6 = arith.constant 0 : index
    %4 = vector.load %arg3[%c0_5, %c0_6] : memref<1x32xf32, #tpu.memory_space<vmem>>, vector<1x32xf32>
    %5 = vector.broadcast %4 : vector<1x32xf32> to vector<2x32xf32>
    %6 = arith.addf %3, %5 : vector<2x32xf32>
    %c0_7 = arith.constant 0 : index
    %c0_8 = arith.constant 0 : index
    %7 = vector.load %arg4[%c0_7, %c0_8] : memref<2x32xf32, #tpu.memory_space<vmem>>, vector<2x32xf32>
    tpu.vector_store %arg4[%c0_7, %c0_8], %6 {strides = array<i32>} : memref<2x32xf32, #tpu.memory_space<vmem>>, vector<2x32xf32>,
    return
  }
  func.func @transform_0(%arg0: i32) -> (i32, i32, i32) {
    %c0_i32 = arith.constant 0 : i32
    %c0_i32_0 = arith.constant 0 : i32
    %c0_i32_1 = arith.constant 0 : i32
    return %arg0, %c0_i32, %c0_i32_0 : i32, i32, i32
  }
  func.func @transform_1(%arg0: i32) -> (i32, i32) {
    %c0_i32 = arith.constant 0 : i32
    %c0_i32_0 = arith.constant 0 : i32
    %c0_i32_1 = arith.constant 0 : i32
    return %c0_i32, %c0_i32_0 : i32, i32
  }
  func.func @transform_2(%arg0: i32) -> (i32, i32) {
    %c0_i32 = arith.constant 0 : i32
    %c0_i32_0 = arith.constant 0 : i32
    %c0_i32_1 = arith.constant 0 : i32
    return %c0_i32, %c0_i32_0 : i32, i32
  }
  func.func @transform_3(%arg0: i32) -> (i32, i32) {
    %c0_i32 = arith.constant 0 : i32
    %c0_i32_0 = arith.constant 0 : i32
    return %arg0, %c0_i32 : i32, i32
  }
}

</mosaic_0001>

<llo_original>
// kernel: tpu_custom_call.1
$region0: #{tpu_custom_call.1}
  #allocation0 [shape = 'u32[]', space=smem, size = 0x4, offset = 0x4, fixed_abs, tag = 'smem constant byte address 0x4 - core index']
  #allocation1 [shape = 'u32[144,128]{1,0:T(1,128)}', space=vmem, size = 0x12000, scoped, tag = 'internal scratch']
  %s0 = inlined_call_operand.hbm [shape: f32[2,32,256], index: 0, kind: input, shape index: {}]
  %s1 = inlined_call_operand.hbm [shape: f32[32,32], index: 1, kind: input, shape index: {}]
  %s2 = inlined_call_operand.vmem [shape: f32[1,32], index: 2, kind: input, shape index: {}]
  %s3 = inlined_call_operand.hbm [shape: f32[2,32], index: 3, kind: output, shape index: {}]
  %s4 = sld [smem:[#allocation0]]
  $region30: #{tpu_custom_call.1} parent=0
    _
  %s6 = ssub.s32 1, %s4
  %s7 = scalar_select 0, %s6, %s4
  $region1: #{tpu_custom_call.1} parent=0
    #allocation2 [shape = 'u8[65536]{0}', space=vmem, size = 0x10000, scoped, tag = 'input window, operand 0, single buffered']
    #allocation3 [shape = 's32[1]{0}', space=sflag, size = 0x4, scoped, tag = 'scoped memory for tpu_custom_call.1']
    #allocation4 [shape = 's32[1]{0}', space=sflag, size = 0x4, scoped, tag = 'scoped memory for tpu_custom_call.1']
    #allocation5 [shape = 'u8[16384]{0}', space=vmem, size = 0x4000, scoped, tag = 'input window, operand 1, single buffered']
    #allocation6 [shape = 's32[1]{0}', space=sflag, size = 0x4, scoped, tag = 'scoped memory for tpu_custom_call.1']
    #allocation7 [shape = 'u8[1024]{0}', space=vmem, size = 0x400, scoped, tag = 'output window, operand 0, single buffered']
    %8 = vsyncpa [#allocation3], 0
    %9 = vsyncpa [#allocation6], 0
    %10 = vsyncpa [#allocation4], 0
    // Predicated region
    $region2: #{tpu_custom_call.1} parent=1 // pred_check
      _
    $region3: #{tpu_custom_call.1} parent=1 // pred_check_branch
      %12 = sbr.rel (0) target = $region5
    $region4: #{tpu_custom_call.1} parent=1 // pred_region
      %s14 = ssub.s32 2048, 2048
      %15 = vsyncadd [#allocation3], %s14
      %s16 = sshll.u32 [#allocation2], 4
      %s17 = int_to_ptr.vmem [resolvable:$true] %s16
      %22 = dma.hbm_to_vmem [thread:$0]  %s0, 2048, %s17, [#allocation3], 256, 256, 16
    $region5: #{tpu_custom_call.1} parent=1 // pred_fallthru
      _
    // Predicated region
    $region6: #{tpu_custom_call.1} parent=1 // pred_check
      _
    $region7: #{tpu_custom_call.1} parent=1 // pred_check_branch
      %24 = sbr.rel (0) target = $region9
    $region8: #{tpu_custom_call.1} parent=1 // pred_region
      %s26 = ssub.s32 512, 512
      %27 = vsyncadd [#allocation6], %s26
      %s28 = sshll.u32 [#allocation5], 4
      %s29 = int_to_ptr.vmem [resolvable:$true] %s28
      %34 = dma.hbm_to_vmem [thread:$0]  %s1, 512, %s29, [#allocation6], 128, 128, 8
    $region9: #{tpu_custom_call.1} parent=1 // pred_fallthru
      _
    // Predicated region
    $region10: #{tpu_custom_call.1} parent=1 // pred_check
      _
    $region11: #{tpu_custom_call.1} parent=1 // pred_check_branch
      %36 = sbr.rel (0) target = $region13
    $region12: #{tpu_custom_call.1} parent=1 // pred_region
      _
    $region13: #{tpu_custom_call.1} parent=1 // pred_fallthru
      _
    // Predicated region
    $region14: #{tpu_custom_call.1} parent=1 // pred_check
      _
    $region15: #{tpu_custom_call.1} parent=1 // pred_check_branch
      %38 = sbr.rel (0) target = $region17
    $region16: #{tpu_custom_call.1} parent=1 // pred_region
      %39 = dma.done [#allocation3], 2048
    $region17: #{tpu_custom_call.1} parent=1 // pred_fallthru
      _
    // Predicated region
    $region18: #{tpu_custom_call.1} parent=1 // pred_check
      _
    $region19: #{tpu_custom_call.1} parent=1 // pred_check_branch
      %41 = sbr.rel (0) target = $region21
    $region20: #{tpu_custom_call.1} parent=1 // pred_region
      %42 = dma.done [#allocation6], 512
    $region21: #{tpu_custom_call.1} parent=1 // pred_fallthru
      _
    %v43 = vld [vmem:[#allocation2] sm:$0xff]
    %v44 = vld [vmem:[#allocation2 + $0x8] sm:$0xff]
    %v45 = vld [vmem:[#allocation2 + $0x10] sm:$0xff]
    %v46 = vld [vmem:[#allocation2 + $0x18] sm:$0xff]
    %v47 = vld [vmem:[#allocation2 + $0x20] sm:$0xff]
    %v48 = vld [vmem:[#allocation2 + $0x28] sm:$0xff]
    %v49 = vld [vmem:[#allocation2 + $0x30] sm:$0xff]
    %v50 = vld [vmem:[#allocation2 + $0x38] sm:$0xff]
    %v51 = vld [vmem:[#allocation2 + $0x40] sm:$0xff]
    %v52 = vld [vmem:[#allocation2 + $0x48] sm:$0xff]
    %v53 = vld [vmem:[#allocation2 + $0x50] sm:$0xff]
    %v54 = vld [vmem:[#allocation2 + $0x58] sm:$0xff]
    %v55 = vld [vmem:[#allocation2 + $0x60] sm:$0xff]
    %v56 = vld [vmem:[#allocation2 + $0x68] sm:$0xff]
    %v57 = vld [vmem:[#allocation2 + $0x70] sm:$0xff]
    %v58 = vld [vmem:[#allocation2 + $0x78] sm:$0xff]
    %v59 = vadd.f32 %v43, %v44
    %60 = vadd.xlane.f32.xlu0 %v59
    %v61 = vpop.xlane.xlu0 %60
    %v62 = vadd.f32 %v45, %v46
    %63 = vadd.xlane.f32.xlu0 %v62
    %v64 = vpop.xlane.xlu0 %63
    %v65 = vadd.f32 %v47, %v48
    %66 = vadd.xlane.f32.xlu0 %v65
    %v67 = vpop.xlane.xlu0 %66
    %v68 = vadd.f32 %v49, %v50
    %69 = vadd.xlane.f32.xlu0 %v68
    %v70 = vpop.xlane.xlu0 %69
    %v71 = vadd.f32 %v51, %v52
    %72 = vadd.xlane.f32.xlu0 %v71
    %v73 = vpop.xlane.xlu0 %72
    %v74 = vadd.f32 %v53, %v54
    %75 = vadd.xlane.f32.xlu0 %v74
    %v76 = vpop.xlane.xlu0 %75
    %v77 = vadd.f32 %v55, %v56
    %78 = vadd.xlane.f32.xlu0 %v77
    %v79 = vpop.xlane.xlu0 %78
    %v80 = vadd.f32 %v57, %v58
    %81 = vadd.xlane.f32.xlu0 %v80
    %v82 = vpop.xlane.xlu0 %81
    %v83 = vld [vmem:[#allocation5] sm:$0xff]
    %v84 = vld [vmem:[#allocation5 + $0x8] sm:$0xff]
    %v85 = vld [vmem:[#allocation5 + $0x10] sm:$0xff]
    %v86 = vld [vmem:[#allocation5 + $0x18] sm:$0xff]
    %v87 = vld [vmem:[%s2] sm:$0x1]
    %v89 = vlaneseq
    %v90 = vshrl.u32 %v89, 7
    %v91 = vsub.s32 0, %v90
    %v92 = vrot.slane %v87, %v91
    %v102 = vlaneseq
    %v103 = vand.u32 %v102, 127
    %v104 = vlaneseq
    %v105 = vshrl.u32 %v104, 7
    %v106 = vsub.s32 %v103, %v105
    %v107 = vrot.slane %v61, %v106
    %v108 = vadd.s32 %v103, 4294967288
    %v109 = vlaneseq
    %v110 = vshrl.u32 %v109, 7
    %v111 = vsub.s32 %v108, %v110
    %v112 = vrot.slane %v64, %v111
    %vm113 = vcmask 130112
    %v114 = vsel %vm113, %v112, %v107
    %v115 = vadd.s32 %v103, 4294967280
    %v116 = vlaneseq
    %v117 = vshrl.u32 %v116, 7
    %v118 = vsub.s32 %v115, %v117
    %v119 = vrot.slane %v67, %v118
    %vm120 = vcmask 195712
    %v121 = vsel %vm120, %v119, %v114
    %v122 = vadd.s32 %v103, 4294967272
    %v123 = vlaneseq
    %v124 = vshrl.u32 %v123, 7
    %v125 = vsub.s32 %v122, %v124
    %v126 = vrot.slane %v70, %v125
    %vm127 = vcmask 261312
    %v128 = vsel %vm127, %v126, %v121
    %v129 = vlaneseq
    %v130 = vshrl.u32 %v129, 7
    %v131 = vsub.s32 %v103, %v130
    %v132 = vrot.slane %v73, %v131
    %v133 = vlaneseq
    %v134 = vshrl.u32 %v133, 7
    %v135 = vsub.s32 %v108, %v134
    %v136 = vrot.slane %v76, %v135
    %v137 = vsel %vm113, %v136, %v132
    %v138 = vlaneseq
    %v139 = vshrl.u32 %v138, 7
    %v140 = vsub.s32 %v115, %v139
    %v141 = vrot.slane %v79, %v140
    %v142 = vsel %vm120, %v141, %v137
    %v143 = vlaneseq
    %v144 = vshrl.u32 %v143, 7
    %v145 = vsub.s32 %v122, %v144
    %v146 = vrot.slane %v82, %v145
    %v147 = vsel %vm127, %v146, %v142
    %vm148 = vcmask 1041409
    %v149 = vsel %vm148, %v147, %v128
    %vm150 = vcmask 261120
    %v151 = vsel %vm150, %v149, 0
    %153 = vmatprep.subr.mxu0 0.0
    %154 = vmatpush1.msra.mxu0 0.0
    %155 = vmatprep.subr.mxu0 0.0
    %156 = vmatpush1.msra.mxu0 0.0
    %157 = vmatprep.subr.mxu0 0.0
    %158 = vmatpush1.msra.mxu0 0.0
    %159 = vmatprep.subr.mxu0 0.0
    %160 = vmatpush1.msra.mxu0 0.0
    %161 = vmatprep.subr.mxu0 0.0
    %162 = vmatpush1.msra.mxu0 0.0
    %163 = vmatprep.subr.mxu0 0.0
    %164 = vmatpush1.msra.mxu0 0.0
    %165 = vmatprep.subr.mxu0 0.0
    %166 = vmatpush1.msra.mxu0 0.0
    %167 = vmatprep.subr.mxu0 0.0
    %168 = vmatpush1.msra.mxu0 0.0
    %169 = vmatprep.subr.mxu0 0.0
    %170 = vmatpush1.msra.mxu0 0.0
    %171 = vmatprep.subr.mxu0 0.0
    %172 = vmatpush1.msra.mxu0 0.0
    %173 = vmatprep.subr.mxu0 0.0
    %174 = vmatpush1.msra.mxu0 0.0
    %175 = vmatprep.subr.mxu0 0.0
    %176 = vmatpush1.msra.mxu0 0.0
    %177 = vmatprep.subr.mxu0 0.0
    %178 = vmatpush1.msra.mxu0 %v86
    %179 = vmatprep.subr.mxu0 0.0
    %180 = vmatpush1.msra.mxu0 %v85
    %181 = vmatprep.subr.mxu0 0.0
    %182 = vmatpush1.msra.mxu0 %v84
    %183 = vmatprep.subr.mxu0 0.0
    %184 = vmatpush1.msra.mxu0 %v83
    %185 = vmatprep.subr.mxu0 0.0
    %186 = vmatpush2.msra.mxu0 0.0
    %187 = vmatprep.subr.mxu0 0.0
    %188 = vmatpush2.msra.mxu0 0.0
    %189 = vmatprep.subr.mxu0 0.0
    %190 = vmatpush2.msra.mxu0 0.0
    %191 = vmatprep.subr.mxu0 0.0
    %192 = vmatpush2.msra.mxu0 0.0
    %193 = vmatprep.subr.mxu0 0.0
    %194 = vmatpush2.msra.mxu0 0.0
    %195 = vmatprep.subr.mxu0 0.0
    %196 = vmatpush2.msra.mxu0 0.0
    %197 = vmatprep.subr.mxu0 0.0
    %198 = vmatpush2.msra.mxu0 0.0
    %199 = vmatprep.subr.mxu0 0.0
    %200 = vmatpush2.msra.mxu0 0.0
    %201 = vmatprep.subr.mxu0 0.0
    %202 = vmatpush2.msra.mxu0 0.0
    %203 = vmatprep.subr.mxu0 0.0
    %204 = vmatpush2.msra.mxu0 0.0
    %205 = vmatprep.subr.mxu0 0.0
    %206 = vmatpush2.msra.mxu0 0.0
    %207 = vmatprep.subr.mxu0 0.0
    %208 = vmatpush2.msra.mxu0 0.0
    %209 = vmatprep.subr.mxu0 0.0
    %210 = vmatpush2.msra.mxu0 0.0
    %211 = vmatprep.subr.mxu0 0.0
    %212 = vmatpush2.msra.mxu0 0.0
    %213 = vmatprep.subr.mxu0 0.0
    %214 = vmatpush2.msra.mxu0 0.0
    %215 = vmatprep.subr.mxu0 0.0
    %216 = vmatpush2.msra.mxu0 0.0
    %217 = vmatprep.mubr.f32.mxu0 0.0
    %218 = vmatmul.mubr.f32.gmra.mxu0 %v151
    %v219 = vpop.f32.mrf.mxu0
    %v220 = vadd.f32 %v92, %v219
    %v221 = vpop.f32.mrf.mxu0
    %222 = vdwg.mxu0
    %vm223 = vcmask 254976
    %224 = vst.msk [vmem:[#allocation7] sm:$0x3] %vm223, %v220
    // Predicated region
    $region22: #{tpu_custom_call.1} parent=1 // pred_check
      _
    $region23: #{tpu_custom_call.1} parent=1 // pred_check_branch
      %226 = sbr.rel (0) target = $region25
    $region24: #{tpu_custom_call.1} parent=1 // pred_region
      %s228 = ssub.s32 32, 32
      %229 = vsyncadd [#allocation4], %s228
      %s231 = sshll.u32 [#allocation7], 4
      %s232 = int_to_ptr.vmem [resolvable:$true] %s231
      %234 = dma.vmem_to_hbm [thread:$0]  %s232, 32, %s3, [#allocation4]
    $region25: #{tpu_custom_call.1} parent=1 // pred_fallthru
      _
    // Predicated region
    $region26: #{tpu_custom_call.1} parent=1 // pred_check
      _
    $region27: #{tpu_custom_call.1} parent=1 // pred_check_branch
      %236 = sbr.rel (0) target = $region29
    $region28: #{tpu_custom_call.1} parent=1 // pred_region
      %237 = dma.done [#allocation4], 32
    $region29: #{tpu_custom_call.1} parent=1 // pred_fallthru
      _
    %238 = vsyncpa [#allocation3], 1
    %239 = vsyncpa [#allocation6], 1
    %240 = vsyncpa [#allocation4], 1

</llo_original>
